<compile_context>
chip_gen: v5e
topology: v5e:2x2
jax: 0.10.0
libtpu: 0.0.40
codegen_flags: <defaults>
</compile_context>

<pallas_src>
import jax
import jax.numpy as jnp
from jax.experimental import pallas as pl
from jax.experimental.pallas import tpu as pltpu


def _identity_kernel(x_ref, o_ref):
    # Elementwise pass-through on the VPU: the placeholder compute a derived
    # class would replace with its real forward body.
    o_ref[...] = x_ref[...]


@jax.jit
def _pallas_identity_debug(x):
    """Debug-only Pallas scaffolding: grid-less, lane-dense pass-through.

    Not used on the default path (a no-op return is free and numerically
    identical); kept only to validate the pallas_call plumbing that a derived
    class will build on.
    """
    total = x.size
    assert total % 128 == 0, "flatten requires a multiple of 128 elements"
    rows = total // 128
    # Lane-dense 2D view: last dim = 128 -> full-width vector loads/stores;
    # second-to-last dim (16 here) is a multiple of 16, so the layout remains
    # sub-tile-free for both f32 (8-sublane) and bf16 (16-sublane) vregs.
    x2d = x.reshape(rows, 128)
    out = pl.pallas_call(
        _identity_kernel,
        out_shape=jax.ShapeDtypeStruct(x2d.shape, x2d.dtype),
        # Grid-less: whole array is a single resident VMEM block — no
        # pipeline prologue/epilogue bookkeeping for a size-1 grid.
        in_specs=[pl.BlockSpec(memory_space=pltpu.MemorySpace.VMEM)],
        out_specs=pl.BlockSpec(memory_space=pltpu.MemorySpace.VMEM),
    )(x2d)
    return out.reshape(x.shape)


def _passthrough(x, *, debug_pallas=False):
    """Scaffolding hook for derived classes.

    Default: return x unchanged at zero cost (the review-recommended path for
    an identity).  With debug_pallas=True, route through the Pallas copy to
    exercise the kernel plumbing.
    """
    if debug_pallas:
        return _pallas_identity_debug(x)
    return x


class QNetwork:
    """JAX/Pallas port of the PyTorch base QNetwork (abstract)."""

    def __init__(self, n_actions):
        self.n_actions = n_actions
        # Base class declares no parameters; derived classes would initialize
        # conv/FC weights deterministically here.

    def forward(self, x):
        # Exact forward-pass semantics of the PyTorch base class:
        print('BaseQNetwork forward method called, please implement this method in the derived class')
        return  # returns None, matching the reference module


if __name__ == "__main__":
    key = jax.random.PRNGKey(0)
    # Small NCHW input consistent with a conv-style Q-network derived class.
    x = jax.random.normal(key, (2, 4, 16, 16), dtype=jnp.float32)

    net = QNetwork(n_actions=6)

    # Reproduce the module's forward exactly (prints message, returns None).
    result = net.forward(x)
    assert result is None

    # Default scaffolding path: free no-op return, numerically identical.
    y_fast = _passthrough(x)
    assert y_fast is x

    # Debug path: exercise the Pallas kernel once and block on its result.
    y = _passthrough(x, debug_pallas=True)
    jax.block_until_ready(y)
    assert y.shape == x.shape
    assert y.dtype == x.dtype
    assert jnp.allclose(y, x)

    print("KERNEL_OK")
</pallas_src>

<mosaic_0001>
module attributes {stable_mosaic.version = 11 : i64} {
  func.func @_identity_kernel(%arg0: memref<16x128xf32, #tpu.memory_space<vmem>>, %arg1: memref<16x128xf32, #tpu.memory_space<vmem>>) attributes {dimension_semantics = [], scalar_prefetch = 0 : i64, scratch_operands = 0 : i64, tpu.core_type = #tpu.core_type<tc>} {
    %c0 = arith.constant 0 : index
    %c0_0 = arith.constant 0 : index
    %0 = vector.load %arg0[%c0, %c0_0] : memref<16x128xf32, #tpu.memory_space<vmem>>, vector<16x128xf32>
    %c0_1 = arith.constant 0 : index
    %c0_2 = arith.constant 0 : index
    %1 = vector.load %arg1[%c0_1, %c0_2] : memref<16x128xf32, #tpu.memory_space<vmem>>, vector<16x128xf32>
    tpu.vector_store %arg1[%c0_1, %c0_2], %0 {strides = array<i32>} : memref<16x128xf32, #tpu.memory_space<vmem>>, vector<16x128xf32>,
    return
  }
}

</mosaic_0001>

<llo_original>
// kernel: _pallas_identity_debug.1
$region0: #{_pallas_identity_debug.1}
  #allocation0 [shape = 'u32[]', space=smem, size = 0x4, offset = 0x4, fixed_abs, tag = 'smem constant byte address 0x4 - core index']
  #allocation1 [shape = 'u32[72,128]{1,0:T(1,128)}', space=vmem, size = 0x9000, scoped, tag = 'internal scratch']
  %s0 = inlined_call_operand.vmem [shape: f32[16,128], index: 0, kind: input, shape index: {}]
  %s1 = inlined_call_operand.vmem [shape: f32[16,128], index: 1, kind: output, shape index: {}]
  %s2 = sld [smem:[#allocation0]]
  $region14: #{_pallas_identity_debug.1} parent=0
    _
  %s4 = ssub.s32 1, %s2
  %s5 = scalar_select 0, %s4, %s2
  // Predicated region
  $region2: #{_pallas_identity_debug.1} parent=0 // pred_check
    _
  $region3: #{_pallas_identity_debug.1} parent=0 // pred_check_branch
    %7 = sbr.rel (0) target = $region5
  $region4: #{_pallas_identity_debug.1} parent=0 // pred_region
    _
  $region5: #{_pallas_identity_debug.1} parent=0 // pred_fallthru
    _
  %v8 = vld [vmem:[%s0] sm:$0xff]
  %v9 = vld [vmem:[%s0 + $0x8] sm:$0xff]
  %10 = vst [vmem:[%s1] sm:$0xff] %v8
  %11 = vst [vmem:[%s1 + $0x8] sm:$0xff] %v9
  // Predicated region
  $region6: #{_pallas_identity_debug.1} parent=0 // pred_check
    _
  $region7: #{_pallas_identity_debug.1} parent=0 // pred_check_branch
    %13 = sbr.rel (0) target = $region9
  $region8: #{_pallas_identity_debug.1} parent=0 // pred_region
    _
  $region9: #{_pallas_identity_debug.1} parent=0 // pred_fallthru
    _
  // Predicated region
  $region10: #{_pallas_identity_debug.1} parent=0 // pred_check
    _
  $region11: #{_pallas_identity_debug.1} parent=0 // pred_check_branch
    %15 = sbr.rel (0) target = $region13
  $region12: #{_pallas_identity_debug.1} parent=0 // pred_region
    _
  $region13: #{_pallas_identity_debug.1} parent=0 // pred_fallthru
    _

</llo_original>
